<compile_context>
chip_gen: v7x
topology: tpu7x:2x2x1
jax: 0.10.0
libtpu: 0.0.40
codegen_flags: <defaults>
</compile_context>

<pallas_src>
import functools
import math

import jax
import jax.numpy as jnp
from jax.experimental import pallas as pl
from jax.experimental.pallas import tpu as pltpu


def _detail_loss_kernel(hf_ref, gt_ref, out_ref,
                        bce_acc, inter_acc, union_acc,
                        *, nsteps, n_chunks, fold_w, tile_lanes, tail,
                        inv_nd, inv_n, eps):
    k = pl.program_id(0)

    @pl.when(k == 0)
    def _init():
        bce_acc[...] = jnp.zeros_like(bce_acc)
        inter_acc[...] = jnp.zeros_like(inter_acc)
        union_acc[...] = jnp.zeros_like(union_acc)

    x = hf_ref[...].astype(jnp.float32)   # (N, S, tile_lanes) prediction in (0,1)
    y = gt_ref[...].astype(jnp.float32)   # (N, S, tile_lanes) target in [0,1]

    if tail:
        # Last grid step is a partial block: zero invalid lanes *before* any
        # math.  x=y=0 contributes exactly 0 to BCE (the -100 log clamp makes
        # 0*log(0) -> 0) and to both dice sums; garbage from the partial DMA
        # never reaches the accumulators.
        lane = jax.lax.broadcasted_iota(jnp.int32, x.shape, dimension=2)
        limit = jnp.where(k == nsteps - 1, tail, tile_lanes)
        valid = lane < limit
        x = jnp.where(valid, x, 0.0)
        y = jnp.where(valid, y, 0.0)

    # ---- BCELoss elementwise term (PyTorch clamps log at -100) ----
    log_x = jnp.maximum(jnp.log(x), -100.0)
    log_1mx = jnp.maximum(jnp.log(1.0 - x), -100.0)
    bce_elem = -(y * log_x + (1.0 - y) * log_1mx)

    # ---- Dice partial terms (union fused as a single sum of x + y) ----
    prod = x * y
    both = x + y

    def fold(a):
        # Pairwise tree-fold of tile_lanes -> fold_w lanes (lane-aligned static
        # slices, pure VPU adds, log2(n_chunks) dependent depth).  Cross-lane
        # XLU reductions are deferred to the epilogue.
        if n_chunks == 1:
            return a
        chunks = [a[:, :, c * fold_w:(c + 1) * fold_w] for c in range(n_chunks)]
        while len(chunks) > 1:
            nxt = [chunks[i] + chunks[i + 1]
                   for i in range(0, len(chunks) - 1, 2)]
            if len(chunks) % 2:
                nxt.append(chunks[-1])
            chunks = nxt
        return chunks[0]

    bce_acc[...] += fold(bce_elem)
    inter_acc[...] += fold(prod)
    union_acc[...] += fold(both)

    @pl.when(k == nsteps - 1)
    def _finalize():
        bce = jnp.sum(bce_acc[...]) * inv_nd                       # scalar
        inter = jnp.sum(inter_acc[...], axis=2)                    # (N, S)
        inter = jnp.sum(inter, axis=1, keepdims=True)              # (N, 1)
        union = jnp.sum(union_acc[...], axis=2)
        union = jnp.sum(union, axis=1, keepdims=True)              # (N, 1)
        dice_per = (2.0 * inter + eps) / (union + eps)             # (N, 1)
        dice = 1.0 - jnp.sum(dice_per) * inv_n                     # scalar
        loss = 10.0 * bce + dice

        lane_o = jax.lax.broadcasted_iota(jnp.int32, (1, 128), 1)
        row = jnp.where(lane_o == 0, loss,
              jnp.where(lane_o == 1, bce,
              jnp.where(lane_o == 2, dice, 0.0)))
        out_ref[...] = row


def detail_loss(hf: jax.Array, hf_gt: jax.Array, *,
                target_block_bytes: int = 4 * 1024 * 1024):
    """Pallas implementation of DetailLoss.forward.

    Args:
      hf:    (N, C, H, W) predictions in (0, 1)   [NCHW, like PyTorch].
             bf16 inputs are supported (halves HBM traffic); math is f32.
      hf_gt: (N, C, H, W) targets in [0, 1]
      target_block_bytes: per-input HBM bytes moved per grid step.
    Returns:
      (loss, {'bceloss': bce, 'dice_loss': dice})  -- f32 scalars
    """
    N = hf.shape[0]
    D = math.prod(hf.shape[1:])
    itemsize = jnp.dtype(hf.dtype).itemsize

    # Sublane packing factor: view each example's D elements as (S, D // S).
    S = 1
    for s in (8, 4, 2):
        if D % s == 0:
            S = s
            break
    Dc = D // S

    # Contiguous row-major reshape -> pure metadata, no HBM copy.
    x = hf.reshape(N, S, Dc)
    y = hf_gt.reshape(N, S, Dc)

    # Lane tile width: multiple of 128 targeting ~target_block_bytes per input
    # per step, or the full (possibly unaligned) Dc if it already fits.
    row_bytes = max(1, N * S * itemsize)
    target_lanes = max(128, (target_block_bytes // row_bytes) // 128 * 128)
    if Dc <= target_lanes:
        tile_lanes = Dc                       # full dim (any value allowed)
        nsteps = 1
        tail = 0
    else:
        tile_lanes = target_lanes             # multiple of 128
        nsteps = pl.cdiv(Dc, tile_lanes)
        rem = Dc - (nsteps - 1) * tile_lanes
        tail = 0 if rem == tile_lanes else rem  # mask last block in-kernel

    # Lane-fold width for the resident accumulators.
    if tile_lanes > 128 and tile_lanes % 128 == 0:
        fold_w = 128
    else:
        fold_w = tile_lanes
    n_chunks = tile_lanes // fold_w

    kernel = functools.partial(
        _detail_loss_kernel,
        nsteps=nsteps,
        n_chunks=n_chunks,
        fold_w=fold_w,
        tile_lanes=tile_lanes,
        tail=tail,
        inv_nd=1.0 / float(N * D),   # true element counts (no padding anywhere)
        inv_n=1.0 / float(N),
        eps=1e-8,
    )

    block_bytes = N * S * tile_lanes * itemsize
    acc_bytes = 3 * N * S * fold_w * 4
    # 2 inputs x 2 pipeline buffers x block + accumulators + headroom.
    vmem_limit = int(min(128 << 20,
                         max(32 << 20, 4 * block_bytes + acc_bytes + (2 << 20))))

    cost = pl.CostEstimate(
        flops=10 * N * D,
        transcendentals=2 * N * D,
        bytes_accessed=2 * N * D * itemsize + 128 * 4,
    )

    out = pl.pallas_call(
        kernel,
        out_shape=jax.ShapeDtypeStruct((1, 128), jnp.float32),
        grid=(nsteps,),
        in_specs=[
            pl.BlockSpec((N, S, tile_lanes), lambda k: (0, 0, k)),
            pl.BlockSpec((N, S, tile_lanes), lambda k: (0, 0, k)),
        ],
        out_specs=pl.BlockSpec((1, 128), lambda k: (0, 0)),
        scratch_shapes=[
            pltpu.VMEM((N, S, fold_w), jnp.float32),   # bce lane accumulator
            pltpu.VMEM((N, S, fold_w), jnp.float32),   # sum(x*y) per-n lanes
            pltpu.VMEM((N, S, fold_w), jnp.float32),   # sum(x+y) per-n lanes
        ],
        compiler_params=pltpu.CompilerParams(
            dimension_semantics=("arbitrary",),
            vmem_limit_bytes=vmem_limit,
        ),
        cost_estimate=cost,
    )(x, y)

    loss = out[0, 0]
    bce = out[0, 1]
    dice = out[0, 2]
    return loss, {"bceloss": bce, "dice_loss": dice}


def _reference(hf, hf_gt):
    # Pure-JAX reference mirroring the PyTorch module.
    x = hf.astype(jnp.float32)
    y = hf_gt.astype(jnp.float32)
    bce = jnp.mean(-(y * jnp.maximum(jnp.log(x), -100.0)
                     + (1.0 - y) * jnp.maximum(jnp.log(1.0 - x), -100.0)))
    N = x.shape[0]
    xf = x.reshape(N, -1)
    yf = y.reshape(N, -1)
    inter = jnp.sum(xf * yf, axis=1)
    union = jnp.sum(xf, axis=1) + jnp.sum(yf, axis=1)
    dice = 1.0 - jnp.mean((2.0 * inter + 1e-8) / (union + 1e-8))
    return 10.0 * bce + dice, bce, dice


def _check(hf, hf_gt, **kw):
    loss, parts = detail_loss(hf, hf_gt, **kw)
    jax.block_until_ready((loss, parts))
    ref_loss, ref_bce, ref_dice = _reference(hf, hf_gt)
    assert jnp.allclose(loss, ref_loss, rtol=1e-5, atol=1e-5)
    assert jnp.allclose(parts["bceloss"], ref_bce, rtol=1e-5, atol=1e-5)
    assert jnp.allclose(parts["dice_loss"], ref_dice, rtol=1e-5, atol=1e-5)


if __name__ == "__main__":
    key = jax.random.PRNGKey(0)
    k1, k2, k3, k4 = jax.random.split(key, 4)

    # Main check: N=2, C=4, H=W=16 -> D = 1024 (S=8, Dc=128, single step).
    N, C, H, W = 2, 4, 16, 16
    hf = jax.nn.sigmoid(jax.random.normal(k1, (N, C, H, W), dtype=jnp.float32))
    hf_gt = jax.random.uniform(k2, (N, C, H, W), dtype=jnp.float32)
    _check(hf, hf_gt)

    # Second check: ragged lane tail (D=2304 -> Dc=288, forced 128-lane tiles
    # -> 3 grid steps with a 32-lane masked tail) to exercise in-kernel masking.
    hf2 = jax.nn.sigmoid(jax.random.normal(k3, (2, 4, 24, 24), dtype=jnp.float32))
    gt2 = jax.random.uniform(k4, (2, 4, 24, 24), dtype=jnp.float32)
    _check(hf2, gt2, target_block_bytes=1)

    print("KERNEL_OK")
</pallas_src>

<mosaic_0001>
module attributes {stable_mosaic.version = 11 : i64} {
  func.func @_detail_loss_kernel(%arg0: i32, %arg1: memref<2x8x128xf32, #tpu.memory_space<vmem>>, %arg2: memref<2x8x128xf32, #tpu.memory_space<vmem>>, %arg3: memref<1x128xf32, #tpu.memory_space<vmem>>, %arg4: memref<2x8x128xf32, #tpu.memory_space<vmem>>, %arg5: memref<2x8x128xf32, #tpu.memory_space<vmem>>, %arg6: memref<2x8x128xf32, #tpu.memory_space<vmem>>) attributes {dimension_semantics = [#tpu.dimension_semantics<arbitrary>], iteration_bounds = array<i64: 1>, scalar_prefetch = 0 : i64, scratch_operands = 3 : i64, tpu.core_type = #tpu.core_type<tc>, window_params = [{transform_indices = @transform_0, window_bounds = array<i64: 2, 8, 128>}, {transform_indices = @transform_1, window_bounds = array<i64: 2, 8, 128>}, {pipeline_mode = #tpu.pipeline_mode<synchronous>, transform_indices = @transform_2, window_bounds = array<i64: 1, 128>}]} {
    %c0_i32 = arith.constant 0 : i32
    %0 = arith.cmpi eq, %arg0, %c0_i32 : i32
    %1 = arith.extui %0 : i1 to i32
    %c0_i32_0 = arith.constant 0 : i32
    %2 = arith.cmpi ne, %1, %c0_i32_0 : i32
    scf.if %2 {
      %cst_30 = arith.constant 0.000000e+00 : f32
      %34 = vector.broadcast %cst_30 : f32 to vector<2x8x128xf32>
      %c0_31 = arith.constant 0 : index
      %c0_32 = arith.constant 0 : index
      %c0_33 = arith.constant 0 : index
      %35 = vector.load %arg4[%c0_31, %c0_32, %c0_33] : memref<2x8x128xf32, #tpu.memory_space<vmem>>, vector<2x8x128xf32>
      tpu.vector_store %arg4[%c0_31, %c0_32, %c0_33], %34 {strides = array<i32>} : memref<2x8x128xf32, #tpu.memory_space<vmem>>, vector<2x8x128xf32>,
      %cst_34 = arith.constant 0.000000e+00 : f32
      %36 = vector.broadcast %cst_34 : f32 to vector<2x8x128xf32>
      %c0_35 = arith.constant 0 : index
      %c0_36 = arith.constant 0 : index
      %c0_37 = arith.constant 0 : index
      %37 = vector.load %arg5[%c0_35, %c0_36, %c0_37] : memref<2x8x128xf32, #tpu.memory_space<vmem>>, vector<2x8x128xf32>
      tpu.vector_store %arg5[%c0_35, %c0_36, %c0_37], %36 {strides = array<i32>} : memref<2x8x128xf32, #tpu.memory_space<vmem>>, vector<2x8x128xf32>,
      %cst_38 = arith.constant 0.000000e+00 : f32
      %38 = vector.broadcast %cst_38 : f32 to vector<2x8x128xf32>
      %c0_39 = arith.constant 0 : index
      %c0_40 = arith.constant 0 : index
      %c0_41 = arith.constant 0 : index
      %39 = vector.load %arg6[%c0_39, %c0_40, %c0_41] : memref<2x8x128xf32, #tpu.memory_space<vmem>>, vector<2x8x128xf32>
      tpu.vector_store %arg6[%c0_39, %c0_40, %c0_41], %38 {strides = array<i32>} : memref<2x8x128xf32, #tpu.memory_space<vmem>>, vector<2x8x128xf32>,
    } else {
    }
    %c0 = arith.constant 0 : index
    %c0_1 = arith.constant 0 : index
    %c0_2 = arith.constant 0 : index
    %3 = vector.load %arg1[%c0, %c0_1, %c0_2] : memref<2x8x128xf32, #tpu.memory_space<vmem>>, vector<2x8x128xf32>
    %c0_3 = arith.constant 0 : index
    %c0_4 = arith.constant 0 : index
    %c0_5 = arith.constant 0 : index
    %4 = vector.load %arg2[%c0_3, %c0_4, %c0_5] : memref<2x8x128xf32, #tpu.memory_space<vmem>>, vector<2x8x128xf32>
    %5 = math.log %3 : vector<2x8x128xf32>
    %cst = arith.constant -1.000000e+02 : f32
    %6 = vector.broadcast %cst : f32 to vector<2x8x128xf32>
    %7 = arith.maximumf %5, %6 : vector<2x8x128xf32>
    %cst_6 = arith.constant 1.000000e+00 : f32
    %8 = vector.broadcast %cst_6 : f32 to vector<2x8x128xf32>
    %9 = arith.subf %8, %3 : vector<2x8x128xf32>
    %10 = math.log %9 : vector<2x8x128xf32>
    %cst_7 = arith.constant -1.000000e+02 : f32
    %11 = vector.broadcast %cst_7 : f32 to vector<2x8x128xf32>
    %12 = arith.maximumf %10, %11 : vector<2x8x128xf32>
    %13 = arith.mulf %4, %7 : vector<2x8x128xf32>
    %cst_8 = arith.constant 1.000000e+00 : f32
    %14 = vector.broadcast %cst_8 : f32 to vector<2x8x128xf32>
    %15 = arith.subf %14, %4 : vector<2x8x128xf32>
    %16 = arith.mulf %15, %12 : vector<2x8x128xf32>
    %17 = arith.addf %13, %16 : vector<2x8x128xf32>
    %cst_9 = arith.constant 0.000000e+00 : f32
    %18 = vector.broadcast %cst_9 : f32 to vector<2x8x128xf32>
    %19 = arith.subf %18, %17 : vector<2x8x128xf32>
    %20 = arith.mulf %3, %4 : vector<2x8x128xf32>
    %21 = arith.addf %3, %4 : vector<2x8x128xf32>
    %c0_10 = arith.constant 0 : index
    %c0_11 = arith.constant 0 : index
    %c0_12 = arith.constant 0 : index
    %22 = vector.load %arg4[%c0_10, %c0_11, %c0_12] : memref<2x8x128xf32, #tpu.memory_space<vmem>>, vector<2x8x128xf32>
    %23 = arith.addf %22, %19 : vector<2x8x128xf32>
    %c0_13 = arith.constant 0 : index
    %c0_14 = arith.constant 0 : index
    %c0_15 = arith.constant 0 : index
    %24 = vector.load %arg4[%c0_13, %c0_14, %c0_15] : memref<2x8x128xf32, #tpu.memory_space<vmem>>, vector<2x8x128xf32>
    tpu.vector_store %arg4[%c0_13, %c0_14, %c0_15], %23 {strides = array<i32>} : memref<2x8x128xf32, #tpu.memory_space<vmem>>, vector<2x8x128xf32>,
    %c0_16 = arith.constant 0 : index
    %c0_17 = arith.constant 0 : index
    %c0_18 = arith.constant 0 : index
    %25 = vector.load %arg5[%c0_16, %c0_17, %c0_18] : memref<2x8x128xf32, #tpu.memory_space<vmem>>, vector<2x8x128xf32>
    %26 = arith.addf %25, %20 : vector<2x8x128xf32>
    %c0_19 = arith.constant 0 : index
    %c0_20 = arith.constant 0 : index
    %c0_21 = arith.constant 0 : index
    %27 = vector.load %arg5[%c0_19, %c0_20, %c0_21] : memref<2x8x128xf32, #tpu.memory_space<vmem>>, vector<2x8x128xf32>
    tpu.vector_store %arg5[%c0_19, %c0_20, %c0_21], %26 {strides = array<i32>} : memref<2x8x128xf32, #tpu.memory_space<vmem>>, vector<2x8x128xf32>,
    %c0_22 = arith.constant 0 : index
    %c0_23 = arith.constant 0 : index
    %c0_24 = arith.constant 0 : index
    %28 = vector.load %arg6[%c0_22, %c0_23, %c0_24] : memref<2x8x128xf32, #tpu.memory_space<vmem>>, vector<2x8x128xf32>
    %29 = arith.addf %28, %21 : vector<2x8x128xf32>
    %c0_25 = arith.constant 0 : index
    %c0_26 = arith.constant 0 : index
    %c0_27 = arith.constant 0 : index
    %30 = vector.load %arg6[%c0_25, %c0_26, %c0_27] : memref<2x8x128xf32, #tpu.memory_space<vmem>>, vector<2x8x128xf32>
    tpu.vector_store %arg6[%c0_25, %c0_26, %c0_27], %29 {strides = array<i32>} : memref<2x8x128xf32, #tpu.memory_space<vmem>>, vector<2x8x128xf32>,
    %c0_i32_28 = arith.constant 0 : i32
    %31 = arith.cmpi eq, %arg0, %c0_i32_28 : i32
    %32 = arith.extui %31 : i1 to i32
    %c0_i32_29 = arith.constant 0 : i32
    %33 = arith.cmpi ne, %32, %c0_i32_29 : i32
    scf.if %33 {
      %c0_30 = arith.constant 0 : index
      %c0_31 = arith.constant 0 : index
      %c0_32 = arith.constant 0 : index
      %34 = vector.load %arg4[%c0_30, %c0_31, %c0_32] : memref<2x8x128xf32, #tpu.memory_space<vmem>>, vector<2x8x128xf32>
      %35 = vector.shape_cast %34 : vector<2x8x128xf32> to vector<1x2x8x128xf32>
      %cst_33 = arith.constant dense<0.000000e+00> : vector<1xf32>
      %36 = vector.multi_reduction <add>, %35, %cst_33 [1, 2, 3] : vector<1x2x8x128xf32> to vector<1xf32>
      %37 = vector.shape_cast %36 : vector<1xf32> to vector<1x1x1x1xf32>
      %38 = vector.extract %37[0, 0, 0, 0] : f32 from vector<1x1x1x1xf32>
      %cst_34 = arith.constant 4.8828125E-4 : f32
      %39 = arith.mulf %38, %cst_34 : f32
      %c0_35 = arith.constant 0 : index
      %c0_36 = arith.constant 0 : index
      %c0_37 = arith.constant 0 : index
      %40 = vector.load %arg5[%c0_35, %c0_36, %c0_37] : memref<2x8x128xf32, #tpu.memory_space<vmem>>, vector<2x8x128xf32>
      %cst_38 = arith.constant dense<0.000000e+00> : vector<2x8xf32>
      %41 = vector.multi_reduction <add>, %40, %cst_38 [2] : vector<2x8x128xf32> to vector<2x8xf32>
      %cst_39 = arith.constant dense<0.000000e+00> : vector<2xf32>
      %42 = vector.multi_reduction <add>, %41, %cst_39 [1] : vector<2x8xf32> to vector<2xf32>
      %43 = vector.shape_cast %42 : vector<2xf32> to vector<2x1xf32>
      %c0_40 = arith.constant 0 : index
      %c0_41 = arith.constant 0 : index
      %c0_42 = arith.constant 0 : index
      %44 = vector.load %arg6[%c0_40, %c0_41, %c0_42] : memref<2x8x128xf32, #tpu.memory_space<vmem>>, vector<2x8x128xf32>
      %cst_43 = arith.constant dense<0.000000e+00> : vector<2x8xf32>
      %45 = vector.multi_reduction <add>, %44, %cst_43 [2] : vector<2x8x128xf32> to vector<2x8xf32>
      %cst_44 = arith.constant dense<0.000000e+00> : vector<2xf32>
      %46 = vector.multi_reduction <add>, %45, %cst_44 [1] : vector<2x8xf32> to vector<2xf32>
      %47 = vector.shape_cast %46 : vector<2xf32> to vector<2x1xf32>
      %cst_45 = arith.constant 2.000000e+00 : f32
      %48 = vector.broadcast %cst_45 : f32 to vector<2x1xf32>
      %49 = arith.mulf %48, %43 : vector<2x1xf32>
      %cst_46 = arith.constant 9.99999993E-9 : f32
      %50 = vector.broadcast %cst_46 : f32 to vector<2x1xf32>
      %51 = arith.addf %49, %50 : vector<2x1xf32>
      %cst_47 = arith.constant 9.99999993E-9 : f32
      %52 = vector.broadcast %cst_47 : f32 to vector<2x1xf32>
      %53 = arith.addf %47, %52 : vector<2x1xf32>
      %54 = arith.divf %51, %53 : vector<2x1xf32>
      %55 = vector.shape_cast %54 : vector<2x1xf32> to vector<1x2x1xf32>
      %cst_48 = arith.constant dense<0.000000e+00> : vector<1xf32>
      %56 = vector.multi_reduction <add>, %55, %cst_48 [1, 2] : vector<1x2x1xf32> to vector<1xf32>
      %57 = vector.shape_cast %56 : vector<1xf32> to vector<1x1x1xf32>
      %58 = vector.extract %57[0, 0, 0] : f32 from vector<1x1x1xf32>
      %cst_49 = arith.constant 5.000000e-01 : f32
      %59 = arith.mulf %58, %cst_49 : f32
      %cst_50 = arith.constant 1.000000e+00 : f32
      %60 = arith.subf %cst_50, %59 : f32
      %cst_51 = arith.constant 1.000000e+01 : f32
      %61 = arith.mulf %cst_51, %39 : f32
      %62 = arith.addf %61, %60 : f32
      %63 = tpu.iota {dimensions = array<i32: 1>} : vector<1x128xi32>
      %c0_i32_52 = arith.constant 0 : i32
      %64 = vector.broadcast %c0_i32_52 : i32 to vector<1x128xi32>
      %65 = arith.cmpi eq, %63, %64 : vector<1x128xi32>
      %c1_i32 = arith.constant 1 : i32
      %66 = vector.broadcast %c1_i32 : i32 to vector<1x128xi32>
      %67 = arith.cmpi eq, %63, %66 : vector<1x128xi32>
      %c2_i32 = arith.constant 2 : i32
      %68 = vector.broadcast %c2_i32 : i32 to vector<1x128xi32>
      %69 = arith.cmpi eq, %63, %68 : vector<1x128xi32>
      %cst_53 = arith.constant 0.000000e+00 : f32
      %70 = vector.broadcast %60 : f32 to vector<1x128xf32>
      %71 = vector.broadcast %cst_53 : f32 to vector<1x128xf32>
      %72 = arith.select %69, %70, %71 : vector<1x128xi1>, vector<1x128xf32>
      %73 = vector.broadcast %39 : f32 to vector<1x128xf32>
      %74 = arith.select %67, %73, %72 : vector<1x128xi1>, vector<1x128xf32>
      %75 = vector.broadcast %62 : f32 to vector<1x128xf32>
      %76 = arith.select %65, %75, %74 : vector<1x128xi1>, vector<1x128xf32>
      %c0_54 = arith.constant 0 : index
      %c0_55 = arith.constant 0 : index
      %77 = vector.load %arg3[%c0_54, %c0_55] : memref<1x128xf32, #tpu.memory_space<vmem>>, vector<1x128xf32>
      tpu.vector_store %arg3[%c0_54, %c0_55], %76 {strides = array<i32>} : memref<1x128xf32, #tpu.memory_space<vmem>>, vector<1x128xf32>,
    } else {
    }
    return
  }
  func.func @transform_0(%arg0: i32) -> (i32, i32, i32) {
    %c0_i32 = arith.constant 0 : i32
    %c0_i32_0 = arith.constant 0 : i32
    %c0_i32_1 = arith.constant 0 : i32
    return %c0_i32, %c0_i32_0, %arg0 : i32, i32, i32
  }
  func.func @transform_1(%arg0: i32) -> (i32, i32, i32) {
    %c0_i32 = arith.constant 0 : i32
    %c0_i32_0 = arith.constant 0 : i32
    %c0_i32_1 = arith.constant 0 : i32
    return %c0_i32, %c0_i32_0, %arg0 : i32, i32, i32
  }
  func.func @transform_2(%arg0: i32) -> (i32, i32) {
    %c0_i32 = arith.constant 0 : i32
    %c0_i32_0 = arith.constant 0 : i32
    %c0_i32_1 = arith.constant 0 : i32
    return %c0_i32, %c0_i32_0 : i32, i32
  }
}

</mosaic_0001>

<llo_original>
// kernel: tpu_custom_call.1
$region0: #{tpu_custom_call.1}
  #allocation0 [shape = 'u32[]', space=smem, size = 0x4, offset = 0x4, fixed_abs, tag = 'smem constant byte address 0x4 - core index']
  #allocation1 [shape = 'u32[144,128]{1,0:T(1,128)}', space=vmem, size = 0x12000, scoped, tag = 'internal scratch']
  #allocation2 [shape = 'f32[2,8,128]{2,1,0:T(8,128)}', space=vmem, size = 0x2000, scoped, tag = 'scratch operand']
  #allocation3 [shape = 'f32[2,8,128]{2,1,0:T(8,128)}', space=vmem, size = 0x2000, scoped, tag = 'scratch operand']
  #allocation4 [shape = 'f32[2,8,128]{2,1,0:T(8,128)}', space=vmem, size = 0x2000, scoped, tag = 'scratch operand']
  %s0 = inlined_call_operand.hbm [shape: f32[2,8,128], index: 0, kind: input, shape index: {}]
  %s1 = inlined_call_operand.hbm [shape: f32[2,8,128], index: 1, kind: input, shape index: {}]
  %s2 = inlined_call_operand.hbm [shape: f32[1,128], index: 2, kind: output, shape index: {}]
  %s3 = sld [smem:[#allocation0]]
  $region34: #{tpu_custom_call.1} parent=0
    _
  %s5 = ssub.s32 1, %s3
  %s6 = scalar_select 0, %s5, %s3
  $region1: #{tpu_custom_call.1} parent=0
    #allocation5 [shape = 'u8[8192]{0}', space=vmem, size = 0x2000, scoped, tag = 'input window, operand 0, single buffered']
    #allocation6 [shape = 's32[1]{0}', space=sflag, size = 0x4, scoped, tag = 'scoped memory for tpu_custom_call.1']
    #allocation7 [shape = 's32[1]{0}', space=sflag, size = 0x4, scoped, tag = 'scoped memory for tpu_custom_call.1']
    #allocation8 [shape = 'u8[8192]{0}', space=vmem, size = 0x2000, scoped, tag = 'input window, operand 1, single buffered']
    #allocation9 [shape = 's32[1]{0}', space=sflag, size = 0x4, scoped, tag = 'scoped memory for tpu_custom_call.1']
    #allocation10 [shape = 'u8[512]{0}', space=vmem, size = 0x400, scoped, tag = 'output window, operand 0, single buffered']
    %7 = vsyncpa [#allocation6], 0
    %8 = vsyncpa [#allocation9], 0
    %9 = vsyncpa [#allocation7], 0
    // Predicated region
    $region2: #{tpu_custom_call.1} parent=1 // pred_check
      _
    $region3: #{tpu_custom_call.1} parent=1 // pred_check_branch
      %11 = sbr.rel (0) target = $region5
    $region4: #{tpu_custom_call.1} parent=1 // pred_region
      %s13 = ssub.s32 256, 256
      %14 = vsyncadd [#allocation6], %s13
      %s15 = sshll.u32 [#allocation5], 4
      %s16 = int_to_ptr.vmem [resolvable:$true] %s15
      %21 = dma.hbm_to_vmem [thread:$0]  %s0, 256, %s16, [#allocation6], 128, 128, 8
    $region5: #{tpu_custom_call.1} parent=1 // pred_fallthru
      _
    // Predicated region
    $region6: #{tpu_custom_call.1} parent=1 // pred_check
      _
    $region7: #{tpu_custom_call.1} parent=1 // pred_check_branch
      %23 = sbr.rel (0) target = $region9
    $region8: #{tpu_custom_call.1} parent=1 // pred_region
      %s25 = ssub.s32 256, 256
      %26 = vsyncadd [#allocation9], %s25
      %s27 = sshll.u32 [#allocation8], 4
      %s28 = int_to_ptr.vmem [resolvable:$true] %s27
      %33 = dma.hbm_to_vmem [thread:$0]  %s1, 256, %s28, [#allocation9], 128, 128, 8
    $region9: #{tpu_custom_call.1} parent=1 // pred_fallthru
      _
    // Predicated region
    $region10: #{tpu_custom_call.1} parent=1 // pred_check
      _
    $region11: #{tpu_custom_call.1} parent=1 // pred_check_branch
      %35 = sbr.rel (0) target = $region13
    $region12: #{tpu_custom_call.1} parent=1 // pred_region
      %36 = dma.done [#allocation6], 256
    $region13: #{tpu_custom_call.1} parent=1 // pred_fallthru
      _
    // Predicated region
    $region14: #{tpu_custom_call.1} parent=1 // pred_check
      _
    $region15: #{tpu_custom_call.1} parent=1 // pred_check_branch
      %38 = sbr.rel (0) target = $region17
    $region16: #{tpu_custom_call.1} parent=1 // pred_region
      %39 = dma.done [#allocation9], 256
    $region17: #{tpu_custom_call.1} parent=1 // pred_fallthru
      _
    %p40 = scmp.eq.s32.totalorder 0, 0
    // Predicated region
    $region18: #{tpu_custom_call.1} parent=1 // pred_check
      %p41 = pneg %p40
    $region19: #{tpu_custom_call.1} parent=1 // pred_check_branch
      %43 = sbr.rel (%p41) target = $region21
    $region20: #{tpu_custom_call.1} parent=1 // pred_region
      %44 = vst [vmem:[#allocation2] sm:$0xff] 0.0
      %45 = vst [vmem:[#allocation2 + $0x8] sm:$0xff] 0.0
      %46 = vst [vmem:[#allocation3] sm:$0xff] 0.0
      %47 = vst [vmem:[#allocation3 + $0x8] sm:$0xff] 0.0
      %48 = vst [vmem:[#allocation4] sm:$0xff] 0.0
      %49 = vst [vmem:[#allocation4 + $0x8] sm:$0xff] 0.0
    $region21: #{tpu_custom_call.1} parent=1 // pred_fallthru
      _
    %v50 = vld [vmem:[#allocation5] sm:$0xff]
    %v51 = vld [vmem:[#allocation5 + $0x8] sm:$0xff]
    %v52 = vld [vmem:[#allocation8] sm:$0xff]
    %v53 = vld [vmem:[#allocation8 + $0x8] sm:$0xff]
    %v54 = vlog2.pop %v50
    %v55 = vmul.f32 %v54, 0.6931472
    %v56 = vlog2.pop %v51
    %v57 = vmul.f32 %v56, 0.6931472
    %v58 = vmax.f32 %v55, -100.0
    %v59 = vmax.f32 %v57, -100.0
    %v60 = vsub.f32 1.0, %v50
    %v61 = vsub.f32 1.0, %v51
    %v62 = vlog2.pop %v60
    %v63 = vmul.f32 %v62, 0.6931472
    %v64 = vlog2.pop %v61
    %v65 = vmul.f32 %v64, 0.6931472
    %v66 = vmax.f32 %v63, -100.0
    %v67 = vmax.f32 %v65, -100.0
    %v68 = vmul.f32 %v52, %v58
    %v69 = vmul.f32 %v53, %v59
    %v70 = vsub.f32 1.0, %v52
    %v71 = vsub.f32 1.0, %v53
    %v72 = vmul.f32 %v70, %v66
    %v73 = vmul.f32 %v71, %v67
    %v74 = vadd.f32 %v68, %v72
    %v75 = vadd.f32 %v69, %v73
    %v76 = vsub.f32 0.0, %v74
    %v77 = vsub.f32 0.0, %v75
    %v78 = vmul.f32 %v50, %v52
    %v79 = vmul.f32 %v51, %v53
    %v80 = vadd.f32 %v50, %v52
    %v81 = vadd.f32 %v51, %v53
    %v82 = vld [vmem:[#allocation2] sm:$0xff]
    %v83 = vld [vmem:[#allocation2 + $0x8] sm:$0xff]
    %v84 = vadd.f32 %v82, %v76
    %v85 = vadd.f32 %v83, %v77
    %86 = vst [vmem:[#allocation2] sm:$0xff] %v84
    %87 = vst [vmem:[#allocation2 + $0x8] sm:$0xff] %v85
    %v88 = vld [vmem:[#allocation3] sm:$0xff]
    %v89 = vld [vmem:[#allocation3 + $0x8] sm:$0xff]
    %v90 = vadd.f32 %v88, %v78
    %v91 = vadd.f32 %v89, %v79
    %92 = vst [vmem:[#allocation3] sm:$0xff] %v90
    %93 = vst [vmem:[#allocation3 + $0x8] sm:$0xff] %v91
    %v94 = vld [vmem:[#allocation4] sm:$0xff]
    %v95 = vld [vmem:[#allocation4 + $0x8] sm:$0xff]
    %v96 = vadd.f32 %v94, %v80
    %v97 = vadd.f32 %v95, %v81
    %98 = vst [vmem:[#allocation4] sm:$0xff] %v96
    %99 = vst [vmem:[#allocation4 + $0x8] sm:$0xff] %v97
    // Predicated region
    $region22: #{tpu_custom_call.1} parent=1 // pred_check
      %p100 = pneg %p40
    $region23: #{tpu_custom_call.1} parent=1 // pred_check_branch
      %102 = sbr.rel (%p100) target = $region25
    $region24: #{tpu_custom_call.1} parent=1 // pred_region
      %v103 = vld [vmem:[#allocation2] sm:$0xff]
      %v104 = vld [vmem:[#allocation2 + $0x8] sm:$0xff]
      %v105 = vadd.f32 %v103, %v104
      %106 = vadd.xlane.f32.xlu0 %v105
      %v107 = vpop.xlane.xlu0 %106
      %v108 = vrot.slane %v107, 4
      %v109 = vadd.f32 %v107, %v108
      %v110 = vrot.slane %v109, 2
      %v111 = vadd.f32 %v109, %v110
      %v112 = vrot.slane %v111, 1
      %v113 = vadd.f32 %v111, %v112
      %s114 = vtos %v113
      %s115 = smul.f32 %s114, 0.00048828125
      %v116 = vld [vmem:[#allocation3] sm:$0xff]
      %v117 = vld [vmem:[#allocation3 + $0x8] sm:$0xff]
      %118 = vadd.xlane.f32.xlu0 %v116
      %v119 = vpop.xlane.xlu0 %118
      %120 = vadd.xlane.f32.xlu0 %v117
      %v121 = vpop.xlane.xlu0 %120
      %v124 = vlaneseq
      %v125 = vand.u32 %v124, 127
      %v126 = vlaneseq
      %v127 = vshrl.u32 %v126, 7
      %v128 = vsub.s32 %v125, %v127
      %v129 = vrot.slane %v119, %v128
      %v130 = vlaneseq
      %v131 = vshrl.u32 %v130, 7
      %v132 = vsub.s32 %v125, %v131
      %v133 = vrot.slane %v121, %v132
      %vm134 = vcmask 1041409
      %v135 = vsel %vm134, %v133, %v129
      %vm137 = vcmask 58368
      %v138 = vsel %vm137, %v135, 0.0
      %139 = vadd.xlane.f32.xlu0 %v138
      %v140 = vpop.xlane.xlu0 %139
      %v141 = vld [vmem:[#allocation4] sm:$0xff]
      %v142 = vld [vmem:[#allocation4 + $0x8] sm:$0xff]
      %143 = vadd.xlane.f32.xlu0 %v141
      %v144 = vpop.xlane.xlu0 %143
      %145 = vadd.xlane.f32.xlu0 %v142
      %v146 = vpop.xlane.xlu0 %145
      %v149 = vlaneseq
      %v150 = vshrl.u32 %v149, 7
      %v151 = vsub.s32 %v125, %v150
      %v152 = vrot.slane %v144, %v151
      %v153 = vlaneseq
      %v154 = vshrl.u32 %v153, 7
      %v155 = vsub.s32 %v125, %v154
      %v156 = vrot.slane %v146, %v155
      %v157 = vsel %vm134, %v156, %v152
      %v159 = vsel %vm137, %v157, 0.0
      %160 = vadd.xlane.f32.xlu0 %v159
      %v161 = vpop.xlane.xlu0 %160
      %v162 = vmul.f32 %v140, 2.0
      %v163 = vadd.f32 %v162, 1e-08
      %v164 = vadd.f32 %v161, 1e-08
      %v165 = vrcp.pop %v164
      %v166 = vmul.f32 %v163, %v165
      %vm167 = vcmask 1024
      %v168 = vsel %vm167, %v166, 0.0
      %169 = vadd.xlane.f32.xlu0 %v168
      %v170 = vpop.xlane.xlu0 %169
      %v171 = vrot.slane %v170, 4
      %v172 = vadd.f32 %v170, %v171
      %v173 = vrot.slane %v172, 2
      %v174 = vadd.f32 %v172, %v173
      %v175 = vrot.slane %v174, 1
      %v176 = vadd.f32 %v174, %v175
      %s177 = vtos %v176
      %s178 = smul.f32 %s177, 0.5
      %s179 = ssub.f32 1.0, %s178
      %s180 = smul.f32 %s115, 10.0
      %s181 = sadd.f32 %s180, %s179
      %vm182 = vcmp.eq.s32.totalorder %v125, 0
      %vm183 = vcmp.eq.s32.totalorder %v125, 1
      %vm184 = vcmp.eq.s32.totalorder %v125, 2
      %v185 = vstv %s179
      %v186 = vsel %vm184, %v185, 0.0
      %v187 = vstv %s115
      %v188 = vsel %vm183, %v187, %v186
      %v189 = vstv %s181
      %v190 = vsel %vm182, %v189, %v188
      %191 = vst [vmem:[#allocation10] sm:$0x1] %v190
    $region25: #{tpu_custom_call.1} parent=1 // pred_fallthru
      _
    // Predicated region
    $region26: #{tpu_custom_call.1} parent=1 // pred_check
      _
    $region27: #{tpu_custom_call.1} parent=1 // pred_check_branch
      %193 = sbr.rel (0) target = $region29
    $region28: #{tpu_custom_call.1} parent=1 // pred_region
      %s195 = ssub.s32 16, 16
      %196 = vsyncadd [#allocation7], %s195
      %s198 = sshll.u32 [#allocation10], 4
      %s199 = int_to_ptr.vmem [resolvable:$true] %s198
      %201 = dma.vmem_to_hbm [thread:$0]  %s199, 16, %s2, [#allocation7]
    $region29: #{tpu_custom_call.1} parent=1 // pred_fallthru
      _
    // Predicated region
    $region30: #{tpu_custom_call.1} parent=1 // pred_check
      _
    $region31: #{tpu_custom_call.1} parent=1 // pred_check_branch
      %203 = sbr.rel (0) target = $region33
    $region32: #{tpu_custom_call.1} parent=1 // pred_region
      %204 = dma.done [#allocation7], 16
    $region33: #{tpu_custom_call.1} parent=1 // pred_fallthru
      _
    %205 = vsyncpa [#allocation6], 1
    %206 = vsyncpa [#allocation9], 1
    %207 = vsyncpa [#allocation7], 1

</llo_original>
